<compile_context>
chip_gen: v5e
topology: v5e:2x2
jax: 0.10.0
libtpu: 0.0.40
codegen_flags: <defaults>
</compile_context>

<pallas_src>
import jax
import jax.numpy as jnp
from jax.experimental import pallas as pl
from jax.experimental.pallas import tpu as pltpu


def _ceil_to(a, m):
    return -(-a // m) * m


def _make_bbox_kernel(chunk, n_chunks):
    def kernel(x_ref, w_ref, b_ref, o_ref):
        # x_ref: (C, t)   channel-major slab of t pixels (HW on lanes)
        # w_ref: (C, Cout); b_ref: (1, Cout) f32; o_ref: (t, Cout)
        w = w_ref[...]
        bias = b_ref[...]                       # (1, Cout) f32, hoisted
        # Statically-unrolled streaming over 128-aligned pixel sub-chunks:
        # each iteration's (chunk, Cout) f32 result is consumed by its own
        # bias-add + store, bounding the live vreg footprint.
        for j in range(n_chunks):
            xs = x_ref[:, j * chunk:(j + 1) * chunk]            # (C, chunk)
            acc = jax.lax.dot_general(
                xs, w,
                dimension_numbers=(((0,), (0,)), ((), ())),      # contract C
                preferred_element_type=jnp.float32)              # (chunk, Cout)
            o_ref[j * chunk:(j + 1) * chunk, :] = (acc + bias).astype(o_ref.dtype)
    return kernel


def bbox_head_forward(x_nchw, weight, bias, *, num_anchors=3, tile_hw=4096,
                      compute_dtype=None):
    """x_nchw: (N, Cin, H, W); weight: (Cout, Cin, 1, 1); bias: (Cout,)."""
    N, C, H, W = x_nchw.shape
    cout = weight.shape[0]
    assert cout == num_anchors * 4
    HW = H * W
    out_dtype = x_nchw.dtype

    # Free metadata reshapes only — no HBM transpose of x.
    x_r = x_nchw.reshape(N, C, HW)                   # (N, C, HW), channels major
    w_mat = jnp.transpose(weight.reshape(cout, C))   # (C, Cout) — tiny
    b_row = bias.reshape(1, cout).astype(jnp.float32)

    if compute_dtype is not None:
        # Only a net win if the producer (FPN conv) already emits this dtype;
        # casting f32 HBM-resident activations here adds an extra XLA pass.
        x_r = x_r.astype(compute_dtype)
        w_mat = w_mat.astype(compute_dtype)

    # Pixel tile: multiple of 128 (lane axis), as large as useful.
    tile_hw = max(128, (int(tile_hw) // 128) * 128)
    hw_pad = _ceil_to(HW, 128)
    t = min(tile_hw, hw_pad)
    n_tiles = -(-HW // t)
    if N * n_tiles < 2 and HW > 128:
        # v7x has 2 TensorCores sharded over "parallel" grid axes; make sure
        # both get at least one step (batch-1 inference on small FPN levels).
        t = min(t, _ceil_to(-(-HW // 2), 128))
        n_tiles = -(-HW // t)
    # In-kernel streaming sub-chunk; t is always a multiple of 128.
    chunk = next(c for c in (512, 384, 256, 128) if t % c == 0)
    n_chunks = t // chunk

    grid = (N, n_tiles)

    cost = pl.CostEstimate(
        flops=2 * N * HW * C * cout,
        transcendentals=0,
        bytes_accessed=(N * HW * C * jnp.dtype(x_r.dtype).itemsize
                        + C * cout * jnp.dtype(w_mat.dtype).itemsize
                        + N * HW * cout * jnp.dtype(out_dtype).itemsize),
    )

    out = pl.pallas_call(
        _make_bbox_kernel(chunk, n_chunks),
        out_shape=jax.ShapeDtypeStruct((N, HW, cout), out_dtype),
        grid_spec=pltpu.PrefetchScalarGridSpec(
            num_scalar_prefetch=0,
            grid=grid,
            in_specs=[
                # (C, t) slab of one image: C on sublanes (full dim), HW on lanes.
                pl.BlockSpec((None, C, t), lambda n, i: (n, 0, i)),
                pl.BlockSpec((C, cout), lambda n, i: (0, 0)),     # full weight
                pl.BlockSpec((1, cout), lambda n, i: (0, 0)),     # bias row
            ],
            out_specs=pl.BlockSpec((None, t, cout), lambda n, i: (n, i, 0)),
        ),
        compiler_params=pltpu.CompilerParams(
            dimension_semantics=("parallel", "parallel")),
        cost_estimate=cost,
    )(x_r, w_mat, b_row)

    # (N, HW, Cout) -> (N, H*W*num_anchors, 4): pure metadata reshape, identical
    # to permute(0, 2, 3, 1).contiguous().view(N, -1, 4).
    return out.reshape(N, HW * num_anchors, 4)


def _reference(x_nchw, weight, bias, num_anchors=3):
    N, C, H, W = x_nchw.shape
    cout = weight.shape[0]
    w_mat = weight.reshape(cout, C)
    out = jnp.einsum('nchw,oc->nhwo', x_nchw, w_mat) + bias.reshape(1, 1, 1, cout)
    return out.reshape(N, H * W * num_anchors, 4)


def _run_case(key, batch, inchannels, hgt, wid, num_anchors=3):
    cout = num_anchors * 4
    kx, kw, kb = jax.random.split(key, 3)
    x = jax.random.normal(kx, (batch, inchannels, hgt, wid), dtype=jnp.float32)
    weight = jax.random.normal(kw, (cout, inchannels, 1, 1), dtype=jnp.float32) * 0.05
    bias = jax.random.normal(kb, (cout,), dtype=jnp.float32) * 0.05

    out = bbox_head_forward(x, weight, bias, num_anchors=num_anchors)
    jax.block_until_ready(out)

    ref = _reference(x, weight, bias, num_anchors=num_anchors)
    assert out.shape == (batch, hgt * wid * num_anchors, 4), out.shape
    assert jnp.allclose(out, ref, atol=1e-4, rtol=1e-4), "mismatch vs reference"
    return out


if __name__ == "__main__":
    key = jax.random.PRNGKey(0)
    k0, k1, k2 = jax.random.split(key, 3)

    # Main case: small shapes consistent with the module's forward.
    _run_case(k0, batch=2, inchannels=32, hgt=16, wid=16)          # HW = 256
    # Review correctness concerns:
    #   HW < tile (oversized block, masked writeback) on a 10x10 level.
    _run_case(k1, batch=1, inchannels=32, hgt=10, wid=10)          # HW = 100
    #   HW not a multiple of 128 + batch-1 megacore split on a 20x20 level.
    _run_case(k2, batch=1, inchannels=32, hgt=20, wid=20)          # HW = 400

    print("KERNEL_OK")
</pallas_src>

<mosaic_0001>
module attributes {stable_mosaic.version = 11 : i64} {
  func.func @kernel(%arg0: i32, %arg1: i32, %arg2: memref<1x32x256xf32, #tpu.memory_space<vmem>>, %arg3: memref<32x12xf32, #tpu.memory_space<vmem>>, %arg4: memref<1x12xf32, #tpu.memory_space<vmem>>, %arg5: memref<1x256x12xf32, #tpu.memory_space<vmem>>) attributes {dimension_semantics = [#tpu.dimension_semantics<parallel>, #tpu.dimension_semantics<parallel>], iteration_bounds = array<i64: 2, 1>, scalar_prefetch = 0 : i64, scratch_operands = 0 : i64, tpu.core_type = #tpu.core_type<tc>, window_params = [{transform_indices = @transform_0, window_bounds = array<i64: 1, 32, 256>}, {pipeline_mode = #tpu.pipeline_mode<synchronous>, transform_indices = @transform_1, window_bounds = array<i64: 32, 12>}, {pipeline_mode = #tpu.pipeline_mode<synchronous>, transform_indices = @transform_2, window_bounds = array<i64: 1, 12>}, {transform_indices = @transform_3, window_bounds = array<i64: 1, 256, 12>}]} {
    %c0 = arith.constant 0 : index
    %c0_0 = arith.constant 0 : index
    %0 = vector.load %arg3[%c0, %c0_0] : memref<32x12xf32, #tpu.memory_space<vmem>>, vector<32x12xf32>
    %c0_1 = arith.constant 0 : index
    %c0_2 = arith.constant 0 : index
    %1 = vector.load %arg4[%c0_1, %c0_2] : memref<1x12xf32, #tpu.memory_space<vmem>>, vector<1x12xf32>
    %c0_3 = arith.constant 0 : index
    %c0_4 = arith.constant 0 : index
    %c0_5 = arith.constant 0 : index
    %2 = vector.load %arg2[%c0_3, %c0_4, %c0_5] : memref<1x32x256xf32, #tpu.memory_space<vmem>>, vector<1x32x256xf32>
    %3 = vector.shape_cast %2 : vector<1x32x256xf32> to vector<32x256xf32>
    %cst = arith.constant dense<0.000000e+00> : vector<256x12xf32>
    %4 = tpu.matmul %3, %0, %cst {dimension_numbers = #tpu.dot_dimension_numbers<[0], [0], [1], [1], [0, 1, 1, 1], [], []>} : vector<32x256xf32>, vector<32x12xf32>, vector<256x12xf32> -> vector<256x12xf32>
    %5 = vector.broadcast %1 : vector<1x12xf32> to vector<256x12xf32>
    %6 = arith.addf %4, %5 : vector<256x12xf32>
    %c0_6 = arith.constant 0 : index
    %c0_7 = arith.constant 0 : index
    %c0_8 = arith.constant 0 : index
    %7 = vector.load %arg5[%c0_6, %c0_7, %c0_8] : memref<1x256x12xf32, #tpu.memory_space<vmem>>, vector<1x256x12xf32>
    %8 = vector.shape_cast %7 : vector<1x256x12xf32> to vector<256x12xf32>
    %9 = vector.shape_cast %6 : vector<256x12xf32> to vector<1x256x12xf32>
    tpu.vector_store %arg5[%c0_6, %c0_7, %c0_8], %9 {strides = array<i32>} : memref<1x256x12xf32, #tpu.memory_space<vmem>>, vector<1x256x12xf32>,
    return
  }
  func.func @transform_0(%arg0: i32, %arg1: i32) -> (i32, i32, i32) {
    %c0_i32 = arith.constant 0 : i32
    %c0_i32_0 = arith.constant 0 : i32
    return %arg0, %c0_i32, %arg1 : i32, i32, i32
  }
  func.func @transform_1(%arg0: i32, %arg1: i32) -> (i32, i32) {
    %c0_i32 = arith.constant 0 : i32
    %c0_i32_0 = arith.constant 0 : i32
    %c0_i32_1 = arith.constant 0 : i32
    return %c0_i32, %c0_i32_0 : i32, i32
  }
  func.func @transform_2(%arg0: i32, %arg1: i32) -> (i32, i32) {
    %c0_i32 = arith.constant 0 : i32
    %c0_i32_0 = arith.constant 0 : i32
    %c0_i32_1 = arith.constant 0 : i32
    return %c0_i32, %c0_i32_0 : i32, i32
  }
  func.func @transform_3(%arg0: i32, %arg1: i32) -> (i32, i32, i32) {
    %c0_i32 = arith.constant 0 : i32
    %c0_i32_0 = arith.constant 0 : i32
    return %arg0, %arg1, %c0_i32 : i32, i32, i32
  }
}

</mosaic_0001>

<llo_original>
// kernel: tpu_custom_call.1
$region0: #{tpu_custom_call.1}
  #allocation0 [shape = 'u32[]', space=smem, size = 0x4, offset = 0x4, fixed_abs, tag = 'smem constant byte address 0x4 - core index']
  #allocation1 [shape = 'u32[72,128]{1,0:T(1,128)}', space=vmem, size = 0x9000, scoped, tag = 'internal scratch']
  %s0 = inlined_call_operand.hbm [shape: f32[2,32,256], index: 0, kind: input, shape index: {}]
  %s1 = inlined_call_operand.vmem [shape: f32[32,12], index: 1, kind: input, shape index: {}]
  %s2 = inlined_call_operand.vmem [shape: f32[1,12], index: 2, kind: input, shape index: {}]
  %s3 = inlined_call_operand.vmem [shape: f32[2,256,12], index: 3, kind: output, shape index: {}]
  %s4 = sld [smem:[#allocation0]]
  $region49: #{tpu_custom_call.1} parent=0
    _
  %s6 = ssub.s32 1, %s4
  %s7 = scalar_select 0, %s6, %s4
  $region1: #{tpu_custom_call.1} parent=0
    #allocation2 [shape = 'u8[65536]{0}', space=vmem, size = 0x10000, scoped, tag = 'input window, operand 0']
    #allocation3 [shape = 's32[2]{0}', space=sflag, size = 0x8, scoped, tag = 'scoped memory for tpu_custom_call.1']
    %8 = vsyncpa [#allocation3], 0
    %s9 = scalar_lea.sflag [#allocation3], 1
    %10 = vsyncpa %s9, 0
    loop: start=0, step=1, limit=4
    $region2: #{tpu_custom_call.1} parent=1 // loop_pre_header
      _
    $region3: #{tpu_custom_call.1} parent=1 // loop_header
      %s12 = sphi 0, %s16
      %p13 = scmp.ge.s32.totalorder %s12, 4
      %s19 = sphi 0, %s31
      %s20 = sphi 0, %s27
      %s21 = sphi 0, %s19
      %s22 = sphi 0, %s20
      %s23 = sphi 0, %s21
      %s24 = sphi 0, %s22
      %s36 = sphi 0, %s38
      %s39 = sphi 0, %s36
      %s40 = sphi 0, %s39
      %s56 = sphi 0, %s40
      %s60 = sphi 0, %s60
      %s62 = sphi 0, %s60
      %s63 = sphi 0, %s62
      %s77 = sphi 0, %s63
      %s81 = sphi 0, %s81
      %s83 = sphi 0, %s81
      %s84 = sphi 0, %s83
      %s98 = sphi 0, %s84
      %s106 = sphi 0, %s108
      %s109 = sphi 0, %s106
      %s110 = sphi 0, %s109
      %s126 = sphi 0, %s110
    $region4: #{tpu_custom_call.1} parent=1 // loop_header_branch
      %15 = sbr.rel (%p13) target = $region8
    $region5: #{tpu_custom_call.1} parent=1 // loop_body
      %s17 = ssub.s32 %s12, 1
      %s18 = ssub.s32 %s12, 2
      %s25 = sadd.s32 1, %s20
      %p26 = scmp.ge.s32.totalorder %s25, 1
      %s27 = scalar_select %p26, 0, %s25
      %s28 = sadd.s32 1, %s19
      %s29 = scalar_select %p26, %s28, %s19
      %p30 = scmp.ge.s32.totalorder %s29, 2
      %s31 = scalar_select %p30, 0, %s29
      %s32 = ssub.s32 %s19, %s31
      %s33 = ssub.s32 %s20, %s27
      %s34 = sor.u32 %s32, %s33
      %p35 = scmp.eq.s32.totalorder %s34, 0
      %s37 = sadd.s32 %s36, 1
      %s38 = scalar_select %p35, %s36, %s37
      %p41 = pneg %p35
      %p42 = scmp.eq.s32.totalorder %s12, 1
      %p43 = por %p41, %p42
      %p44 = scmp.ne.s32.totalorder %s36, %s39
      %p45 = scmp.eq.s32.totalorder %s12, 0
      %p46 = por %p44, %p45
      %p47 = scmp.ne.s32.totalorder %s36, %s39
      %p48 = scmp.eq.s32.totalorder %s17, 1
      %p49 = por %p47, %p48
      %p50 = scmp.ne.s32.totalorder %s39, %s40
      %p51 = scmp.eq.s32.totalorder %s17, 0
      %p52 = por %p50, %p51
      %p53 = scmp.ne.s32.totalorder %s39, %s40
      %p54 = scmp.eq.s32.totalorder %s18, 1
      %p55 = por %p53, %p54
      %p57 = scmp.ne.s32.totalorder %s40, %s56
      %p58 = scmp.eq.s32.totalorder %s18, 0
      %p59 = por %p57, %p58
      %s61 = sadd.s32 %s60, 1
      %p64 = scmp.eq.s32.totalorder %s12, 1
      %p65 = scmp.ne.s32.totalorder %s60, %s62
      %p66 = scmp.eq.s32.totalorder %s12, 0
      %p67 = por %p65, %p66
      %p68 = scmp.ne.s32.totalorder %s60, %s62
      %p69 = scmp.eq.s32.totalorder %s17, 1
      %p70 = por %p68, %p69
      %p71 = scmp.ne.s32.totalorder %s62, %s63
      %p72 = scmp.eq.s32.totalorder %s17, 0
      %p73 = por %p71, %p72
      %p74 = scmp.ne.s32.totalorder %s62, %s63
      %p75 = scmp.eq.s32.totalorder %s18, 1
      %p76 = por %p74, %p75
      %p78 = scmp.ne.s32.totalorder %s63, %s77
      %p79 = scmp.eq.s32.totalorder %s18, 0
      %p80 = por %p78, %p79
      %s82 = sadd.s32 %s81, 1
      %p85 = scmp.eq.s32.totalorder %s12, 1
      %p86 = scmp.ne.s32.totalorder %s81, %s83
      %p87 = scmp.eq.s32.totalorder %s12, 0
      %p88 = por %p86, %p87
      %p89 = scmp.ne.s32.totalorder %s81, %s83
      %p90 = scmp.eq.s32.totalorder %s17, 1
      %p91 = por %p89, %p90
      %p92 = scmp.ne.s32.totalorder %s83, %s84
      %p93 = scmp.eq.s32.totalorder %s17, 0
      %p94 = por %p92, %p93
      %p95 = scmp.ne.s32.totalorder %s83, %s84
      %p96 = scmp.eq.s32.totalorder %s18, 1
      %p97 = por %p95, %p96
      %p99 = scmp.ne.s32.totalorder %s84, %s98
      %p100 = scmp.eq.s32.totalorder %s18, 0
      %p101 = por %p99, %p100
      %s102 = ssub.s32 %s19, %s31
      %s103 = ssub.s32 %s20, %s27
      %s104 = sor.u32 %s102, %s103
      %p105 = scmp.eq.s32.totalorder %s104, 0
      %s107 = sadd.s32 %s106, 1
      %s108 = scalar_select %p105, %s106, %s107
      %p111 = pneg %p105
      %p112 = scmp.eq.s32.totalorder %s12, 1
      %p113 = por %p111, %p112
      %p114 = scmp.ne.s32.totalorder %s106, %s109
      %p115 = scmp.eq.s32.totalorder %s12, 0
      %p116 = por %p114, %p115
      %p117 = scmp.ne.s32.totalorder %s106, %s109
      %p118 = scmp.eq.s32.totalorder %s17, 1
      %p119 = por %p117, %p118
      %p120 = scmp.ne.s32.totalorder %s109, %s110
      %p121 = scmp.eq.s32.totalorder %s17, 0
      %p122 = por %p120, %p121
      %p123 = scmp.ne.s32.totalorder %s109, %s110
      %p124 = scmp.eq.s32.totalorder %s18, 1
      %p125 = por %p123, %p124
      %p127 = scmp.ne.s32.totalorder %s110, %s126
      %p128 = scmp.eq.s32.totalorder %s18, 0
      %p129 = por %p127, %p128
      %p130 = scmp.le.s32.totalorder 1, %s12
      %p131 = scmp.lt.s32.totalorder %s12, 3
      %p132 = pnand %p130, %p131
      %p133 = pneg %p132
      // Predicated region
      $region9: #{tpu_custom_call.1} parent=5 // pred_check
        _
      $region10: #{tpu_custom_call.1} parent=5 // pred_check_branch
        %135 = sbr.rel (%p132) target = $region12
      $region11: #{tpu_custom_call.1} parent=5 // pred_region
        %s136 = ssub.s32 %s12, 1
        // Predicated region
        $region13: #{tpu_custom_call.1} parent=11 // pred_check
          %p137 = pneg %p73
        $region14: #{tpu_custom_call.1} parent=11 // pred_check_branch
          %139 = sbr.rel (%p137) target = $region16
        $region15: #{tpu_custom_call.1} parent=11 // pred_region
          _
        $region16: #{tpu_custom_call.1} parent=11 // pred_fallthru
          _
        // Predicated region
        $region17: #{tpu_custom_call.1} parent=11 // pred_check
          %p140 = pneg %p94
        $region18: #{tpu_custom_call.1} parent=11 // pred_check_branch
          %142 = sbr.rel (%p140) target = $region20
        $region19: #{tpu_custom_call.1} parent=11 // pred_region
          _
        $region20: #{tpu_custom_call.1} parent=11 // pred_fallthru
          _
      $region12: #{tpu_custom_call.1} parent=5 // pred_fallthru
        _
      %p143 = scmp.lt.s32.totalorder %s12, 2
      // Predicated region
      $region21: #{tpu_custom_call.1} parent=5 // pred_check
        %p144 = pneg %p143
      $region22: #{tpu_custom_call.1} parent=5 // pred_check_branch
        %146 = sbr.rel (%p144) target = $region24
      $region23: #{tpu_custom_call.1} parent=5 // pred_region
        // Predicated region
        $region25: #{tpu_custom_call.1} parent=23 // pred_check
          %p147 = pneg %p46
        $region26: #{tpu_custom_call.1} parent=23 // pred_check_branch
          %149 = sbr.rel (%p147) target = $region28
        $region27: #{tpu_custom_call.1} parent=23 // pred_region
          %s150 = sand.u32 %s36, 1
          %s151 = scalar_lea.sflag [#allocation3], %s150
          %s152 = sand.u32 %s36, 1
          %s153 = smul.addr %s152, 64
          %s154 = scalar_lea.vmem [#allocation2], %s153
          %s155 = smul.u32 2, %s20
          %157 = vsyncadd %s151, 0
          %s158 = smul.addr %s19, 8
          %s159 = sadd.s32 %s155, %s158
          %s160 = smul.addr %s159, 8
          %s161 = scalar_lea.hbm %s0, %s160
          %s162 = sshll.u32 %s161, 4
          %s163 = int_to_ptr.hbm [resolvable:$true] %s162
          %s164 = sshll.u32 %s154, 4
          %s165 = int_to_ptr.vmem [resolvable:$true] %s164
          %170 = dma.hbm_to_vmem [thread:$0]  %s163, 1024, %s165, %s151, 256, 256, 16
        $region28: #{tpu_custom_call.1} parent=23 // pred_fallthru
          _
      $region24: #{tpu_custom_call.1} parent=5 // pred_fallthru
        _
      %p171 = scmp.le.s32.totalorder 1, %s12
      %p172 = scmp.lt.s32.totalorder %s12, 3
      %p173 = pnand %p171, %p172
      %p174 = pneg %p173
      // Predicated region
      $region29: #{tpu_custom_call.1} parent=5 // pred_check
        _
      $region30: #{tpu_custom_call.1} parent=5 // pred_check_branch
        %176 = sbr.rel (%p173) target = $region32
      $region31: #{tpu_custom_call.1} parent=5 // pred_region
        %s177 = ssub.s32 %s12, 1
        %s178 = sand.u32 %s39, 1
        %s179 = scalar_lea.sflag [#allocation3], %s178
        %s180 = sand.u32 %s39, 1
        %s181 = smul.addr %s180, 64
        %s182 = scalar_lea.vmem [#allocation2], %s181
        // Predicated region
        $region33: #{tpu_custom_call.1} parent=31 // pred_check
          %p183 = pneg %p52
        $region34: #{tpu_custom_call.1} parent=31 // pred_check_branch
          %185 = sbr.rel (%p183) target = $region36
        $region35: #{tpu_custom_call.1} parent=31 // pred_region
          %187 = dma.done %s179, 1024
        $region36: #{tpu_custom_call.1} parent=31 // pred_fallthru
          _
        %s188 = sand.u32 %s39, 1
        %s189 = scalar_lea.sflag [#allocation3], %s188
        %s190 = sand.u32 %s39, 1
        %s191 = smul.addr %s190, 64
        %s192 = scalar_lea.vmem [#allocation2], %s191
        %p193 = pneg %p52
        %p194 = pneg %p49
        %p195 = pneg %p73
        %p196 = pneg %p70
        %p197 = pneg %p94
        %p198 = pneg %p91
        %p199 = pneg %p122
        %p200 = pneg %p119
        %s201 = smul.u32 32, %s22
        %p202 = scmp.lt.s32.totalorder %s21, 1
        %s203 = scalar_select %p202, %s21, 1
        %p204 = scmp.lt.s32.totalorder %s201, 31
        %s205 = scalar_select %p204, %s201, 31
        %s206 = smul.addr %s203, 32
        %s207 = sadd.s32 %s205, %s206
        %s208 = smul.addr %s207, 8
        %s209 = scalar_lea.vmem %s3, %s208
        %s210 = smul.u32 2, %s22
        %s211 = smul.u32 32, %s22
        %p212 = scmp.lt.s32.totalorder %s21, 1
        %s213 = scalar_select %p212, %s21, 1
        %p214 = scmp.lt.s32.totalorder %s211, 31
        %s215 = scalar_select %p214, %s211, 31
        %s216 = smul.addr %s213, 32
        %s217 = sadd.s32 %s215, %s216
        %s218 = smul.addr %s217, 8
        %s219 = scalar_lea.vmem %s3, %s218
        %s220 = smul.u32 32, %s22
        %v221 = vld [vmem:[%s1] sm:$0xff]
        %v222 = vld [vmem:[%s1 + $0x8] sm:$0xff]
        %v223 = vld [vmem:[%s1 + $0x10] sm:$0xff]
        %v224 = vld [vmem:[%s1 + $0x18] sm:$0xff]
        %v225 = vld [vmem:[%s2] sm:$0x1]
        %v226 = vld [vmem:[%s182] sm:$0xff]
        %v227 = vld [vmem:[%s182 + $0x8] sm:$0xff]
        %v228 = vld [vmem:[%s182 + $0x10] sm:$0xff]
        %v229 = vld [vmem:[%s182 + $0x18] sm:$0xff]
        %v230 = vld [vmem:[%s182 + $0x20] sm:$0xff]
        %v231 = vld [vmem:[%s182 + $0x28] sm:$0xff]
        %v232 = vld [vmem:[%s182 + $0x30] sm:$0xff]
        %v233 = vld [vmem:[%s182 + $0x38] sm:$0xff]
        %v235 = vperm.slane %v225, 0
        %237 = vxpose.xlu0.b32.start [1/16] %v226, 128
        %238 = vxpose.xlu0.b32.cont [2/16] %v228, 128
        %239 = vxpose.xlu0.b32.cont [3/16] %v230, 128
        %240 = vxpose.xlu0.b32.cont [4/16] %v232, 128
        %241 = vxpose.xlu0.b32.cont [5/16] 0.0, 128
        %242 = vxpose.xlu0.b32.cont [6/16] 0.0, 128
        %243 = vxpose.xlu0.b32.cont [7/16] 0.0, 128
        %244 = vxpose.xlu0.b32.cont [8/16] 0.0, 128
        %245 = vxpose.xlu0.b32.cont [9/16] 0.0, 128
        %246 = vxpose.xlu0.b32.cont [10/16] 0.0, 128
        %247 = vxpose.xlu0.b32.cont [11/16] 0.0, 128
        %248 = vxpose.xlu0.b32.cont [12/16] 0.0, 128
        %249 = vxpose.xlu0.b32.cont [13/16] 0.0, 128
        %250 = vxpose.xlu0.b32.cont [14/16] 0.0, 128
        %251 = vxpose.xlu0.b32.cont [15/16] 0.0, 128
        %252 = vxpose.xlu0.b32.end [16/16] 0.0, 128
        %v253 = vpop.trf.xlu0
        %v254 = vpop.trf.xlu0
        %v255 = vpop.trf.xlu0
        %v256 = vpop.trf.xlu0
        %v257 = vpop.trf.xlu0
        %v258 = vpop.trf.xlu0
        %v259 = vpop.trf.xlu0
        %v260 = vpop.trf.xlu0
        %v261 = vpop.trf.xlu0
        %v262 = vpop.trf.xlu0
        %v263 = vpop.trf.xlu0
        %v264 = vpop.trf.xlu0
        %v265 = vpop.trf.xlu0
        %v266 = vpop.trf.xlu0
        %v267 = vpop.trf.xlu0
        %v268 = vpop.trf.xlu0
        %269 = vxpose.xlu0.b32.start [1/16] %v227, 128
        %270 = vxpose.xlu0.b32.cont [2/16] %v229, 128
        %271 = vxpose.xlu0.b32.cont [3/16] %v231, 128
        %272 = vxpose.xlu0.b32.cont [4/16] %v233, 128
        %273 = vxpose.xlu0.b32.cont [5/16] 0.0, 128
        %274 = vxpose.xlu0.b32.cont [6/16] 0.0, 128
        %275 = vxpose.xlu0.b32.cont [7/16] 0.0, 128
        %276 = vxpose.xlu0.b32.cont [8/16] 0.0, 128
        %277 = vxpose.xlu0.b32.cont [9/16] 0.0, 128
        %278 = vxpose.xlu0.b32.cont [10/16] 0.0, 128
        %279 = vxpose.xlu0.b32.cont [11/16] 0.0, 128
        %280 = vxpose.xlu0.b32.cont [12/16] 0.0, 128
        %281 = vxpose.xlu0.b32.cont [13/16] 0.0, 128
        %282 = vxpose.xlu0.b32.cont [14/16] 0.0, 128
        %283 = vxpose.xlu0.b32.cont [15/16] 0.0, 128
        %284 = vxpose.xlu0.b32.end [16/16] 0.0, 128
        %v285 = vpop.trf.xlu0
        %v286 = vpop.trf.xlu0
        %v287 = vpop.trf.xlu0
        %v288 = vpop.trf.xlu0
        %v289 = vpop.trf.xlu0
        %v290 = vpop.trf.xlu0
        %v291 = vpop.trf.xlu0
        %v292 = vpop.trf.xlu0
        %v293 = vpop.trf.xlu0
        %v294 = vpop.trf.xlu0
        %v295 = vpop.trf.xlu0
        %v296 = vpop.trf.xlu0
        %v297 = vpop.trf.xlu0
        %v298 = vpop.trf.xlu0
        %v299 = vpop.trf.xlu0
        %v300 = vpop.trf.xlu0
        %vm301 = vcmask 261120
        %v303 = vsel %vm301, %v253, 0
        %v306 = vsel %vm301, %v254, 0
        %v309 = vsel %vm301, %v255, 0
        %v312 = vsel %vm301, %v256, 0
        %v315 = vsel %vm301, %v257, 0
        %v318 = vsel %vm301, %v258, 0
        %v321 = vsel %vm301, %v259, 0
        %v324 = vsel %vm301, %v260, 0
        %v327 = vsel %vm301, %v261, 0
        %v330 = vsel %vm301, %v262, 0
        %v333 = vsel %vm301, %v263, 0
        %v336 = vsel %vm301, %v264, 0
        %v339 = vsel %vm301, %v265, 0
        %v342 = vsel %vm301, %v266, 0
        %v345 = vsel %vm301, %v267, 0
        %v348 = vsel %vm301, %v268, 0
        %v351 = vsel %vm301, %v285, 0
        %v354 = vsel %vm301, %v286, 0
        %v357 = vsel %vm301, %v287, 0
        %v360 = vsel %vm301, %v288, 0
        %v363 = vsel %vm301, %v289, 0
        %v366 = vsel %vm301, %v290, 0
        %v369 = vsel %vm301, %v291, 0
        %v372 = vsel %vm301, %v292, 0
        %v375 = vsel %vm301, %v293, 0
        %v378 = vsel %vm301, %v294, 0
        %v381 = vsel %vm301, %v295, 0
        %v384 = vsel %vm301, %v296, 0
        %v387 = vsel %vm301, %v297, 0
        %v390 = vsel %vm301, %v298, 0
        %v393 = vsel %vm301, %v299, 0
        %v396 = vsel %vm301, %v300, 0
        %398 = vmatpush.msra.mxu0 0.0
        %399 = vmatpush.msra.mxu0 0.0
        %400 = vmatpush.msra.mxu0 0.0
        %401 = vmatpush.msra.mxu0 0.0
        %402 = vmatpush.msra.mxu0 0.0
        %403 = vmatpush.msra.mxu0 0.0
        %404 = vmatpush.msra.mxu0 0.0
        %405 = vmatpush.msra.mxu0 0.0
        %406 = vmatpush.msra.mxu0 0.0
        %407 = vmatpush.msra.mxu0 0.0
        %408 = vmatpush.msra.mxu0 0.0
        %409 = vmatpush.msra.mxu0 0.0
        %410 = vmatpush.msra.mxu0 %v224
        %411 = vmatpush.msra.mxu0 %v223
        %412 = vmatpush.msra.mxu0 %v222
        %413 = vmatpush.msra.mxu0 %v221
        %414 = vmatmul.f32.gmra.mxu0 %v303
        %v415 = vpop.f32.mrf.mxu0
        %v416 = vadd.f32 %v235, %v415
        %417 = vmatmul.f32.gmra.mxu0 %v306
        %v418 = vpop.f32.mrf.mxu0
        %v419 = vadd.f32 %v235, %v418
        %420 = vmatmul.f32.gmra.mxu0 %v309
        %v421 = vpop.f32.mrf.mxu0
        %v422 = vadd.f32 %v235, %v421
        %423 = vmatmul.f32.gmra.mxu0 %v312
        %v424 = vpop.f32.mrf.mxu0
        %v425 = vadd.f32 %v235, %v424
        %426 = vmatmul.f32.gmra.mxu0 %v315
        %v427 = vpop.f32.mrf.mxu0
        %v428 = vadd.f32 %v235, %v427
        %429 = vmatmul.f32.gmra.mxu0 %v318
        %v430 = vpop.f32.mrf.mxu0
        %v431 = vadd.f32 %v235, %v430
        %432 = vmatmul.f32.gmra.mxu0 %v321
        %v433 = vpop.f32.mrf.mxu0
        %v434 = vadd.f32 %v235, %v433
        %435 = vmatmul.f32.gmra.mxu0 %v324
        %v436 = vpop.f32.mrf.mxu0
        %v437 = vadd.f32 %v235, %v436
        %438 = vmatmul.f32.gmra.mxu0 %v327
        %v439 = vpop.f32.mrf.mxu0
        %v440 = vadd.f32 %v235, %v439
        %441 = vmatmul.f32.gmra.mxu0 %v330
        %v442 = vpop.f32.mrf.mxu0
        %v443 = vadd.f32 %v235, %v442
        %444 = vmatmul.f32.gmra.mxu0 %v333
        %v445 = vpop.f32.mrf.mxu0
        %v446 = vadd.f32 %v235, %v445
        %447 = vmatmul.f32.gmra.mxu0 %v336
        %v448 = vpop.f32.mrf.mxu0
        %v449 = vadd.f32 %v235, %v448
        %450 = vmatmul.f32.gmra.mxu0 %v339
        %v451 = vpop.f32.mrf.mxu0
        %v452 = vadd.f32 %v235, %v451
        %453 = vmatmul.f32.gmra.mxu0 %v342
        %v454 = vpop.f32.mrf.mxu0
        %v455 = vadd.f32 %v235, %v454
        %456 = vmatmul.f32.gmra.mxu0 %v345
        %v457 = vpop.f32.mrf.mxu0
        %v458 = vadd.f32 %v235, %v457
        %459 = vmatmul.f32.gmra.mxu0 %v348
        %v460 = vpop.f32.mrf.mxu0
        %v461 = vadd.f32 %v235, %v460
        %462 = vmatmul.f32.gmra.mxu0 %v351
        %v463 = vpop.f32.mrf.mxu0
        %v464 = vadd.f32 %v235, %v463
        %465 = vmatmul.f32.gmra.mxu0 %v354
        %v466 = vpop.f32.mrf.mxu0
        %v467 = vadd.f32 %v235, %v466
        %468 = vmatmul.f32.gmra.mxu0 %v357
        %v469 = vpop.f32.mrf.mxu0
        %v470 = vadd.f32 %v235, %v469
        %471 = vmatmul.f32.gmra.mxu0 %v360
        %v472 = vpop.f32.mrf.mxu0
        %v473 = vadd.f32 %v235, %v472
        %474 = vmatmul.f32.gmra.mxu0 %v363
        %v475 = vpop.f32.mrf.mxu0
        %v476 = vadd.f32 %v235, %v475
        %477 = vmatmul.f32.gmra.mxu0 %v366
        %v478 = vpop.f32.mrf.mxu0
        %v479 = vadd.f32 %v235, %v478
        %480 = vmatmul.f32.gmra.mxu0 %v369
        %v481 = vpop.f32.mrf.mxu0
        %v482 = vadd.f32 %v235, %v481
        %483 = vmatmul.f32.gmra.mxu0 %v372
        %v484 = vpop.f32.mrf.mxu0
        %v485 = vadd.f32 %v235, %v484
        %486 = vmatmul.f32.gmra.mxu0 %v375
        %v487 = vpop.f32.mrf.mxu0
        %v488 = vadd.f32 %v235, %v487
        %489 = vmatmul.f32.gmra.mxu0 %v378
        %v490 = vpop.f32.mrf.mxu0
        %v491 = vadd.f32 %v235, %v490
        %492 = vmatmul.f32.gmra.mxu0 %v381
        %v493 = vpop.f32.mrf.mxu0
        %v494 = vadd.f32 %v235, %v493
        %495 = vmatmul.f32.gmra.mxu0 %v384
        %v496 = vpop.f32.mrf.mxu0
        %v497 = vadd.f32 %v235, %v496
        %498 = vmatmul.f32.gmra.mxu0 %v387
        %v499 = vpop.f32.mrf.mxu0
        %v500 = vadd.f32 %v235, %v499
        %501 = vmatmul.f32.gmra.mxu0 %v390
        %v502 = vpop.f32.mrf.mxu0
        %v503 = vadd.f32 %v235, %v502
        %504 = vmatmul.f32.gmra.mxu0 %v393
        %v505 = vpop.f32.mrf.mxu0
        %v506 = vadd.f32 %v235, %v505
        %507 = vmatmul.f32.gmra.mxu0 %v396
        %v508 = vpop.f32.mrf.mxu0
        %v509 = vadd.f32 %v235, %v508
        %510 = vdwg.mxu0
        %vm511 = vcmask 97280
        %512 = vst.msk [vmem:[%s219] sm:$0xff] %vm511, %v416
        %513 = vst.msk [vmem:[%s219 + $0x8] sm:$0xff] %vm511, %v419
        %514 = vst.msk [vmem:[%s219 + $0x10] sm:$0xff] %vm511, %v422
        %515 = vst.msk [vmem:[%s219 + $0x18] sm:$0xff] %vm511, %v425
        %516 = vst.msk [vmem:[%s219 + $0x20] sm:$0xff] %vm511, %v428
        %517 = vst.msk [vmem:[%s219 + $0x28] sm:$0xff] %vm511, %v431
        %518 = vst.msk [vmem:[%s219 + $0x30] sm:$0xff] %vm511, %v434
        %519 = vst.msk [vmem:[%s219 + $0x38] sm:$0xff] %vm511, %v437
        %520 = vst.msk [vmem:[%s219 + $0x40] sm:$0xff] %vm511, %v440
        %521 = vst.msk [vmem:[%s219 + $0x48] sm:$0xff] %vm511, %v443
        %522 = vst.msk [vmem:[%s219 + $0x50] sm:$0xff] %vm511, %v446
        %523 = vst.msk [vmem:[%s219 + $0x58] sm:$0xff] %vm511, %v449
        %524 = vst.msk [vmem:[%s219 + $0x60] sm:$0xff] %vm511, %v452
        %525 = vst.msk [vmem:[%s219 + $0x68] sm:$0xff] %vm511, %v455
        %526 = vst.msk [vmem:[%s219 + $0x70] sm:$0xff] %vm511, %v458
        %527 = vst.msk [vmem:[%s219 + $0x78] sm:$0xff] %vm511, %v461
        %528 = vst.msk [vmem:[%s219 + $0x80] sm:$0xff] %vm511, %v464
        %529 = vst.msk [vmem:[%s219 + $0x88] sm:$0xff] %vm511, %v467
        %530 = vst.msk [vmem:[%s219 + $0x90] sm:$0xff] %vm511, %v470
        %531 = vst.msk [vmem:[%s219 + $0x98] sm:$0xff] %vm511, %v473
        %532 = vst.msk [vmem:[%s219 + $0xa0] sm:$0xff] %vm511, %v476
        %533 = vst.msk [vmem:[%s219 + $0xa8] sm:$0xff] %vm511, %v479
        %534 = vst.msk [vmem:[%s219 + $0xb0] sm:$0xff] %vm511, %v482
        %535 = vst.msk [vmem:[%s219 + $0xb8] sm:$0xff] %vm511, %v485
        %536 = vst.msk [vmem:[%s219 + $0xc0] sm:$0xff] %vm511, %v488
        %537 = vst.msk [vmem:[%s219 + $0xc8] sm:$0xff] %vm511, %v491
        %538 = vst.msk [vmem:[%s219 + $0xd0] sm:$0xff] %vm511, %v494
        %539 = vst.msk [vmem:[%s219 + $0xd8] sm:$0xff] %vm511, %v497
        %540 = vst.msk [vmem:[%s219 + $0xe0] sm:$0xff] %vm511, %v500
        %541 = vst.msk [vmem:[%s219 + $0xe8] sm:$0xff] %vm511, %v503
        %542 = vst.msk [vmem:[%s219 + $0xf0] sm:$0xff] %vm511, %v506
        %543 = vst.msk [vmem:[%s219 + $0xf8] sm:$0xff] %vm511, %v509
        %s544 = smul.u32 32, %s22
        %p545 = scmp.lt.s32.totalorder %s21, 1
        %s546 = scalar_select %p545, %s21, 1
        %p547 = scmp.lt.s32.totalorder %s544, 31
        %s548 = scalar_select %p547, %s544, 31
        %s549 = smul.addr %s546, 32
        %s550 = sadd.s32 %s548, %s549
        %s551 = smul.addr %s550, 8
        %s552 = scalar_lea.vmem %s3, %s551
        // Predicated region
        $region37: #{tpu_custom_call.1} parent=31 // pred_check
          %p553 = pneg %p119
        $region38: #{tpu_custom_call.1} parent=31 // pred_check_branch
          %555 = sbr.rel (%p553) target = $region40
        $region39: #{tpu_custom_call.1} parent=31 // pred_region
          %s556 = smul.u32 32, %s22
        $region40: #{tpu_custom_call.1} parent=31 // pred_fallthru
          _
      $region32: #{tpu_custom_call.1} parent=5 // pred_fallthru
        _
      %p557 = scmp.le.s32.totalorder 2, %s12
      // Predicated region
      $region41: #{tpu_custom_call.1} parent=5 // pred_check
        %p558 = pneg %p557
      $region42: #{tpu_custom_call.1} parent=5 // pred_check_branch
        %560 = sbr.rel (%p558) target = $region44
      $region43: #{tpu_custom_call.1} parent=5 // pred_region
        %s561 = ssub.s32 %s12, 2
        // Predicated region
        $region45: #{tpu_custom_call.1} parent=43 // pred_check
          %p562 = pneg %p125
        $region46: #{tpu_custom_call.1} parent=43 // pred_check_branch
          %564 = sbr.rel (%p562) target = $region48
        $region47: #{tpu_custom_call.1} parent=43 // pred_region
          %s565 = smul.u32 32, %s24
          %p566 = scmp.lt.s32.totalorder %s23, 1
          %s567 = scalar_select %p566, %s23, 1
          %p568 = scmp.lt.s32.totalorder %s565, 31
          %s569 = scalar_select %p568, %s565, 31
          %s570 = smul.addr %s567, 32
          %s571 = sadd.s32 %s569, %s570
          %s572 = smul.addr %s571, 8
          %s573 = scalar_lea.vmem %s3, %s572
        $region48: #{tpu_custom_call.1} parent=43 // pred_fallthru
          _
      $region44: #{tpu_custom_call.1} parent=5 // pred_fallthru
        _
    $region6: #{tpu_custom_call.1} parent=1 // loop_footer
      %s16 = sadd.s32 1, %s12
    $region7: #{tpu_custom_call.1} parent=1 // loop_footer_branch
      %11 = sbr.rel target = $region3
    $region8: #{tpu_custom_call.1} parent=1 // loop_exit
      _
    %574 = vsyncpa [#allocation3], 1
    %s575 = scalar_lea.sflag [#allocation3], 1
    %576 = vsyncpa %s575, 1

</llo_original>
